<compile_context>
chip_gen: v7x
topology: tpu7x:2x2x1
jax: 0.10.0
libtpu: 0.0.40
codegen_flags: <defaults>
</compile_context>

<pallas_src>
import math

import jax
import jax.numpy as jnp
from jax import lax
from jax.experimental import pallas as pl
from jax.experimental.pallas import tpu as pltpu

INPUT_DIM = 2
HIDDEN_DIM = 10
OUTPUT_DIM = 1

_LANE = 128          # vreg lane width
_SUB = 8             # vreg sublanes -> register sub-block is (8, 128)
_MIN_TILE = _SUB * _LANE  # 1024: smallest batch tile satisfying the (8,128) rule

# static offsets into the single flattened parameter vector (41 floats)
_W1_OFF = 0                                   # w1[h, k] at 2*h + k (row-major)
_B1_OFF = HIDDEN_DIM * INPUT_DIM              # 20
_W2_OFF = _B1_OFF + HIDDEN_DIM                # 30
_B2_OFF = _W2_OFF + HIDDEN_DIM                # 40
_NPARAM = _B2_OFF + OUTPUT_DIM                # 41


def mlp_kernel(p_ref, x_ref, o_ref):
    """One batch tile, batch laid out sublane+lane dense.

    p_ref : SMEM f32 (41,)  = [w1(20, row-major [h,k]) | b1(10) | w2(10) | b2(1)]
    x_ref : VMEM f32 (INPUT_DIM, R, 128)   R = tb // 128 (multiple of 8)
    o_ref : VMEM f32 (R, 128)
    """
    n_sub = o_ref.shape[0] // _SUB  # static

    def body(sb, carry):
        r0 = pl.multiple_of(sb * _SUB, _SUB)
        rows = pl.ds(r0, _SUB)
        # 2 loads per sub-block; everything below stays in vregs.
        x0 = x_ref[0, rows, :]                       # (8, 128)
        x1 = x_ref[1, rows, :]                       # (8, 128)
        acc = jnp.zeros_like(x0)
        for h in range(HIDDEN_DIM):
            # layer_1: hidden[h] = w1[h,0]*x0 + w1[h,1]*x1 + b1[h]   (VPU FMAs)
            hv = (p_ref[_W1_OFF + 2 * h] * x0
                  + p_ref[_W1_OFF + 2 * h + 1] * x1
                  + p_ref[_B1_OFF + h])
            hv = jnp.maximum(hv, 0.0)                # ReLU
            # layer_2: y += w2[0,h] * relu(hidden[h])
            acc = acc + p_ref[_W2_OFF + h] * hv
        z = acc + p_ref[_B2_OFF]
        # sigmoid = 1 / (1 + exp(-z)); exp on EUP, divide via approx EUP recip.
        o_ref[rows, :] = pl.reciprocal(1.0 + jnp.exp(-z), approx=True)
        return carry

    lax.fori_loop(0, n_sub, body, 0, unroll=True)


def neural_network_forward(x, w1, b1, w2, b2, *, tb=8192):
    """Forward pass matching the PyTorch module.

    x : (B, INPUT_DIM) f32
    w1: (HIDDEN_DIM, INPUT_DIM), b1: (HIDDEN_DIM,)   -- PyTorch nn.Linear layout
    w2: (OUTPUT_DIM, HIDDEN_DIM), b2: (OUTPUT_DIM,)
    Returns (B, OUTPUT_DIM) f32.

    tb is the batch tile (samples per grid step); must be a multiple of 1024.
    8K-64K is a good range for large batches (double-buffered footprint is only
    ~24*tb bytes, far under the scoped VMEM limit on every TPU generation).
    """
    B = x.shape[0]

    # Tile selection: multiple of 1024 for (8,128)-dense blocks; cap so large
    # batches have >=2 grid steps (keeps both v7x TensorCores busy).
    tb = max(_MIN_TILE, (int(tb) // _MIN_TILE) * _MIN_TILE)
    b_min = pl.cdiv(B, _MIN_TILE) * _MIN_TILE
    tb = min(tb, max(_MIN_TILE, (b_min // (2 * _MIN_TILE)) * _MIN_TILE))
    b_pad = pl.cdiv(B, tb) * tb
    rows = b_pad // _LANE            # total sublane rows across the batch

    # Layout plumbing: feature-major, zero-padded, reshaped to a lane-dense slab.
    # (In a fused pipeline, pass x already as (INPUT_DIM, B) to skip this copy.)
    xt = jnp.zeros((INPUT_DIM, b_pad), jnp.float32).at[:, :B].set(
        x.T.astype(jnp.float32))
    xt = xt.reshape(INPUT_DIM, rows, _LANE)          # free metadata reshape

    # Single flattened parameter vector -> one SMEM scalar-prefetch DMA.
    params = jnp.concatenate([
        w1.reshape(-1).astype(jnp.float32),
        b1.reshape(-1).astype(jnp.float32),
        w2.reshape(-1).astype(jnp.float32),
        b2.reshape(-1).astype(jnp.float32),
    ])  # (41,)

    grid = (b_pad // tb,)
    out = pl.pallas_call(
        mlp_kernel,
        out_shape=jax.ShapeDtypeStruct((rows, _LANE), jnp.float32),
        grid_spec=pltpu.PrefetchScalarGridSpec(
            num_scalar_prefetch=1,                   # params -> SMEM
            grid=grid,
            in_specs=[
                pl.BlockSpec((INPUT_DIM, tb // _LANE, _LANE),
                             lambda i, p: (0, i, 0)),
            ],
            out_specs=pl.BlockSpec((tb // _LANE, _LANE),
                                   lambda i, p: (i, 0)),
        ),
        compiler_params=pltpu.CompilerParams(
            dimension_semantics=("parallel",),       # batch axis across TCs
        ),
    )(params, xt)

    # Drop padding, return the module's (B, OUTPUT_DIM) layout.
    return out.reshape(b_pad)[:B].reshape(B, OUTPUT_DIM)


def init_params(key):
    """Deterministic init mirroring the PyTorch module's __init__ (PyTorch layouts).

    layer_1.weight: kaiming_uniform_(nonlinearity='relu') on (hidden, input)
    layer_1.bias / layer_2.*: nn.Linear default uniform(-1/sqrt(fan_in), +).
    """
    k1, k2, k3, k4 = jax.random.split(key, 4)

    gain = math.sqrt(2.0)
    bound1_w = gain * math.sqrt(3.0 / INPUT_DIM)
    w1 = jax.random.uniform(k1, (HIDDEN_DIM, INPUT_DIM), jnp.float32,
                            -bound1_w, bound1_w)
    bound1_b = 1.0 / math.sqrt(INPUT_DIM)
    b1 = jax.random.uniform(k2, (HIDDEN_DIM,), jnp.float32, -bound1_b, bound1_b)

    bound2 = 1.0 / math.sqrt(HIDDEN_DIM)
    w2 = jax.random.uniform(k3, (OUTPUT_DIM, HIDDEN_DIM), jnp.float32,
                            -bound2, bound2)
    b2 = jax.random.uniform(k4, (OUTPUT_DIM,), jnp.float32, -bound2, bound2)
    return w1, b1, w2, b2


if __name__ == "__main__":
    key = jax.random.PRNGKey(0)
    kx, kp = jax.random.split(key)

    batch = 8
    x = jax.random.normal(kx, (batch, INPUT_DIM), jnp.float32)
    w1, b1, w2, b2 = init_params(kp)

    out = neural_network_forward(x, w1, b1, w2, b2)
    out = jax.block_until_ready(out)

    # correctness check against a pure-JAX reference (PyTorch semantics);
    # tolerance loosened slightly for the EUP approx-reciprocal sigmoid.
    ref = jax.nn.sigmoid(jnp.maximum(x @ w1.T + b1, 0.0) @ w2.T + b2)
    assert out.shape == (batch, OUTPUT_DIM)
    assert jnp.allclose(out, ref, atol=1e-3, rtol=1e-3)

    print("KERNEL_OK")
</pallas_src>

<mosaic_0001>
module attributes {stable_mosaic.version = 11 : i64} {
  func.func @mlp_kernel(%arg0: i32, %arg1: memref<41xf32, #tpu.memory_space<smem>>, %arg2: memref<2x8x128xf32, #tpu.memory_space<vmem>>, %arg3: memref<8x128xf32, #tpu.memory_space<vmem>>) attributes {dimension_semantics = [#tpu.dimension_semantics<parallel>], iteration_bounds = array<i64: 1>, scalar_prefetch = 1 : i64, scratch_operands = 0 : i64, tpu.core_type = #tpu.core_type<tc>, window_params = [{transform_indices = @transform_0, window_bounds = array<i64: 2, 8, 128>}, {transform_indices = @transform_1, window_bounds = array<i64: 8, 128>}]} {
    %c0_i32 = arith.constant 0 : i32
    %c8_i32 = arith.constant 8 : i32
    %0 = arith.muli %c0_i32, %c8_i32 : i32
    %1 = tpu.assume_multiple %0, 8 : i32
    %c0 = arith.constant 0 : index
    %2 = arith.index_cast %1 : i32 to index
    %c0_0 = arith.constant 0 : index
    %3 = vector.load %arg2[%c0, %2, %c0_0] : memref<2x8x128xf32, #tpu.memory_space<vmem>>, vector<1x8x128xf32>
    %4 = vector.shape_cast %3 : vector<1x8x128xf32> to vector<8x128xf32>
    %c1 = arith.constant 1 : index
    %5 = arith.index_cast %1 : i32 to index
    %c0_1 = arith.constant 0 : index
    %6 = vector.load %arg2[%c1, %5, %c0_1] : memref<2x8x128xf32, #tpu.memory_space<vmem>>, vector<1x8x128xf32>
    %7 = vector.shape_cast %6 : vector<1x8x128xf32> to vector<8x128xf32>
    %cst = arith.constant 0.000000e+00 : f32
    %8 = vector.broadcast %cst : f32 to vector<8x128xf32>
    %c0_2 = arith.constant 0 : index
    %9 = memref.load %arg1[%c0_2] : memref<41xf32, #tpu.memory_space<smem>>
    %10 = vector.broadcast %9 : f32 to vector<8x128xf32>
    %11 = arith.mulf %10, %4 : vector<8x128xf32>
    %c1_3 = arith.constant 1 : index
    %12 = memref.load %arg1[%c1_3] : memref<41xf32, #tpu.memory_space<smem>>
    %13 = vector.broadcast %12 : f32 to vector<8x128xf32>
    %14 = arith.mulf %13, %7 : vector<8x128xf32>
    %15 = arith.addf %11, %14 : vector<8x128xf32>
    %c20 = arith.constant 20 : index
    %16 = memref.load %arg1[%c20] : memref<41xf32, #tpu.memory_space<smem>>
    %17 = vector.broadcast %16 : f32 to vector<8x128xf32>
    %18 = arith.addf %15, %17 : vector<8x128xf32>
    %cst_4 = arith.constant 0.000000e+00 : f32
    %19 = vector.broadcast %cst_4 : f32 to vector<8x128xf32>
    %20 = arith.maximumf %18, %19 : vector<8x128xf32>
    %c30 = arith.constant 30 : index
    %21 = memref.load %arg1[%c30] : memref<41xf32, #tpu.memory_space<smem>>
    %22 = vector.broadcast %21 : f32 to vector<8x128xf32>
    %23 = arith.mulf %22, %20 : vector<8x128xf32>
    %24 = arith.addf %8, %23 : vector<8x128xf32>
    %c2 = arith.constant 2 : index
    %25 = memref.load %arg1[%c2] : memref<41xf32, #tpu.memory_space<smem>>
    %26 = vector.broadcast %25 : f32 to vector<8x128xf32>
    %27 = arith.mulf %26, %4 : vector<8x128xf32>
    %c3 = arith.constant 3 : index
    %28 = memref.load %arg1[%c3] : memref<41xf32, #tpu.memory_space<smem>>
    %29 = vector.broadcast %28 : f32 to vector<8x128xf32>
    %30 = arith.mulf %29, %7 : vector<8x128xf32>
    %31 = arith.addf %27, %30 : vector<8x128xf32>
    %c21 = arith.constant 21 : index
    %32 = memref.load %arg1[%c21] : memref<41xf32, #tpu.memory_space<smem>>
    %33 = vector.broadcast %32 : f32 to vector<8x128xf32>
    %34 = arith.addf %31, %33 : vector<8x128xf32>
    %cst_5 = arith.constant 0.000000e+00 : f32
    %35 = vector.broadcast %cst_5 : f32 to vector<8x128xf32>
    %36 = arith.maximumf %34, %35 : vector<8x128xf32>
    %c31 = arith.constant 31 : index
    %37 = memref.load %arg1[%c31] : memref<41xf32, #tpu.memory_space<smem>>
    %38 = vector.broadcast %37 : f32 to vector<8x128xf32>
    %39 = arith.mulf %38, %36 : vector<8x128xf32>
    %40 = arith.addf %24, %39 : vector<8x128xf32>
    %c4 = arith.constant 4 : index
    %41 = memref.load %arg1[%c4] : memref<41xf32, #tpu.memory_space<smem>>
    %42 = vector.broadcast %41 : f32 to vector<8x128xf32>
    %43 = arith.mulf %42, %4 : vector<8x128xf32>
    %c5 = arith.constant 5 : index
    %44 = memref.load %arg1[%c5] : memref<41xf32, #tpu.memory_space<smem>>
    %45 = vector.broadcast %44 : f32 to vector<8x128xf32>
    %46 = arith.mulf %45, %7 : vector<8x128xf32>
    %47 = arith.addf %43, %46 : vector<8x128xf32>
    %c22 = arith.constant 22 : index
    %48 = memref.load %arg1[%c22] : memref<41xf32, #tpu.memory_space<smem>>
    %49 = vector.broadcast %48 : f32 to vector<8x128xf32>
    %50 = arith.addf %47, %49 : vector<8x128xf32>
    %cst_6 = arith.constant 0.000000e+00 : f32
    %51 = vector.broadcast %cst_6 : f32 to vector<8x128xf32>
    %52 = arith.maximumf %50, %51 : vector<8x128xf32>
    %c32 = arith.constant 32 : index
    %53 = memref.load %arg1[%c32] : memref<41xf32, #tpu.memory_space<smem>>
    %54 = vector.broadcast %53 : f32 to vector<8x128xf32>
    %55 = arith.mulf %54, %52 : vector<8x128xf32>
    %56 = arith.addf %40, %55 : vector<8x128xf32>
    %c6 = arith.constant 6 : index
    %57 = memref.load %arg1[%c6] : memref<41xf32, #tpu.memory_space<smem>>
    %58 = vector.broadcast %57 : f32 to vector<8x128xf32>
    %59 = arith.mulf %58, %4 : vector<8x128xf32>
    %c7 = arith.constant 7 : index
    %60 = memref.load %arg1[%c7] : memref<41xf32, #tpu.memory_space<smem>>
    %61 = vector.broadcast %60 : f32 to vector<8x128xf32>
    %62 = arith.mulf %61, %7 : vector<8x128xf32>
    %63 = arith.addf %59, %62 : vector<8x128xf32>
    %c23 = arith.constant 23 : index
    %64 = memref.load %arg1[%c23] : memref<41xf32, #tpu.memory_space<smem>>
    %65 = vector.broadcast %64 : f32 to vector<8x128xf32>
    %66 = arith.addf %63, %65 : vector<8x128xf32>
    %cst_7 = arith.constant 0.000000e+00 : f32
    %67 = vector.broadcast %cst_7 : f32 to vector<8x128xf32>
    %68 = arith.maximumf %66, %67 : vector<8x128xf32>
    %c33 = arith.constant 33 : index
    %69 = memref.load %arg1[%c33] : memref<41xf32, #tpu.memory_space<smem>>
    %70 = vector.broadcast %69 : f32 to vector<8x128xf32>
    %71 = arith.mulf %70, %68 : vector<8x128xf32>
    %72 = arith.addf %56, %71 : vector<8x128xf32>
    %c8 = arith.constant 8 : index
    %73 = memref.load %arg1[%c8] : memref<41xf32, #tpu.memory_space<smem>>
    %74 = vector.broadcast %73 : f32 to vector<8x128xf32>
    %75 = arith.mulf %74, %4 : vector<8x128xf32>
    %c9 = arith.constant 9 : index
    %76 = memref.load %arg1[%c9] : memref<41xf32, #tpu.memory_space<smem>>
    %77 = vector.broadcast %76 : f32 to vector<8x128xf32>
    %78 = arith.mulf %77, %7 : vector<8x128xf32>
    %79 = arith.addf %75, %78 : vector<8x128xf32>
    %c24 = arith.constant 24 : index
    %80 = memref.load %arg1[%c24] : memref<41xf32, #tpu.memory_space<smem>>
    %81 = vector.broadcast %80 : f32 to vector<8x128xf32>
    %82 = arith.addf %79, %81 : vector<8x128xf32>
    %cst_8 = arith.constant 0.000000e+00 : f32
    %83 = vector.broadcast %cst_8 : f32 to vector<8x128xf32>
    %84 = arith.maximumf %82, %83 : vector<8x128xf32>
    %c34 = arith.constant 34 : index
    %85 = memref.load %arg1[%c34] : memref<41xf32, #tpu.memory_space<smem>>
    %86 = vector.broadcast %85 : f32 to vector<8x128xf32>
    %87 = arith.mulf %86, %84 : vector<8x128xf32>
    %88 = arith.addf %72, %87 : vector<8x128xf32>
    %c10 = arith.constant 10 : index
    %89 = memref.load %arg1[%c10] : memref<41xf32, #tpu.memory_space<smem>>
    %90 = vector.broadcast %89 : f32 to vector<8x128xf32>
    %91 = arith.mulf %90, %4 : vector<8x128xf32>
    %c11 = arith.constant 11 : index
    %92 = memref.load %arg1[%c11] : memref<41xf32, #tpu.memory_space<smem>>
    %93 = vector.broadcast %92 : f32 to vector<8x128xf32>
    %94 = arith.mulf %93, %7 : vector<8x128xf32>
    %95 = arith.addf %91, %94 : vector<8x128xf32>
    %c25 = arith.constant 25 : index
    %96 = memref.load %arg1[%c25] : memref<41xf32, #tpu.memory_space<smem>>
    %97 = vector.broadcast %96 : f32 to vector<8x128xf32>
    %98 = arith.addf %95, %97 : vector<8x128xf32>
    %cst_9 = arith.constant 0.000000e+00 : f32
    %99 = vector.broadcast %cst_9 : f32 to vector<8x128xf32>
    %100 = arith.maximumf %98, %99 : vector<8x128xf32>
    %c35 = arith.constant 35 : index
    %101 = memref.load %arg1[%c35] : memref<41xf32, #tpu.memory_space<smem>>
    %102 = vector.broadcast %101 : f32 to vector<8x128xf32>
    %103 = arith.mulf %102, %100 : vector<8x128xf32>
    %104 = arith.addf %88, %103 : vector<8x128xf32>
    %c12 = arith.constant 12 : index
    %105 = memref.load %arg1[%c12] : memref<41xf32, #tpu.memory_space<smem>>
    %106 = vector.broadcast %105 : f32 to vector<8x128xf32>
    %107 = arith.mulf %106, %4 : vector<8x128xf32>
    %c13 = arith.constant 13 : index
    %108 = memref.load %arg1[%c13] : memref<41xf32, #tpu.memory_space<smem>>
    %109 = vector.broadcast %108 : f32 to vector<8x128xf32>
    %110 = arith.mulf %109, %7 : vector<8x128xf32>
    %111 = arith.addf %107, %110 : vector<8x128xf32>
    %c26 = arith.constant 26 : index
    %112 = memref.load %arg1[%c26] : memref<41xf32, #tpu.memory_space<smem>>
    %113 = vector.broadcast %112 : f32 to vector<8x128xf32>
    %114 = arith.addf %111, %113 : vector<8x128xf32>
    %cst_10 = arith.constant 0.000000e+00 : f32
    %115 = vector.broadcast %cst_10 : f32 to vector<8x128xf32>
    %116 = arith.maximumf %114, %115 : vector<8x128xf32>
    %c36 = arith.constant 36 : index
    %117 = memref.load %arg1[%c36] : memref<41xf32, #tpu.memory_space<smem>>
    %118 = vector.broadcast %117 : f32 to vector<8x128xf32>
    %119 = arith.mulf %118, %116 : vector<8x128xf32>
    %120 = arith.addf %104, %119 : vector<8x128xf32>
    %c14 = arith.constant 14 : index
    %121 = memref.load %arg1[%c14] : memref<41xf32, #tpu.memory_space<smem>>
    %122 = vector.broadcast %121 : f32 to vector<8x128xf32>
    %123 = arith.mulf %122, %4 : vector<8x128xf32>
    %c15 = arith.constant 15 : index
    %124 = memref.load %arg1[%c15] : memref<41xf32, #tpu.memory_space<smem>>
    %125 = vector.broadcast %124 : f32 to vector<8x128xf32>
    %126 = arith.mulf %125, %7 : vector<8x128xf32>
    %127 = arith.addf %123, %126 : vector<8x128xf32>
    %c27 = arith.constant 27 : index
    %128 = memref.load %arg1[%c27] : memref<41xf32, #tpu.memory_space<smem>>
    %129 = vector.broadcast %128 : f32 to vector<8x128xf32>
    %130 = arith.addf %127, %129 : vector<8x128xf32>
    %cst_11 = arith.constant 0.000000e+00 : f32
    %131 = vector.broadcast %cst_11 : f32 to vector<8x128xf32>
    %132 = arith.maximumf %130, %131 : vector<8x128xf32>
    %c37 = arith.constant 37 : index
    %133 = memref.load %arg1[%c37] : memref<41xf32, #tpu.memory_space<smem>>
    %134 = vector.broadcast %133 : f32 to vector<8x128xf32>
    %135 = arith.mulf %134, %132 : vector<8x128xf32>
    %136 = arith.addf %120, %135 : vector<8x128xf32>
    %c16 = arith.constant 16 : index
    %137 = memref.load %arg1[%c16] : memref<41xf32, #tpu.memory_space<smem>>
    %138 = vector.broadcast %137 : f32 to vector<8x128xf32>
    %139 = arith.mulf %138, %4 : vector<8x128xf32>
    %c17 = arith.constant 17 : index
    %140 = memref.load %arg1[%c17] : memref<41xf32, #tpu.memory_space<smem>>
    %141 = vector.broadcast %140 : f32 to vector<8x128xf32>
    %142 = arith.mulf %141, %7 : vector<8x128xf32>
    %143 = arith.addf %139, %142 : vector<8x128xf32>
    %c28 = arith.constant 28 : index
    %144 = memref.load %arg1[%c28] : memref<41xf32, #tpu.memory_space<smem>>
    %145 = vector.broadcast %144 : f32 to vector<8x128xf32>
    %146 = arith.addf %143, %145 : vector<8x128xf32>
    %cst_12 = arith.constant 0.000000e+00 : f32
    %147 = vector.broadcast %cst_12 : f32 to vector<8x128xf32>
    %148 = arith.maximumf %146, %147 : vector<8x128xf32>
    %c38 = arith.constant 38 : index
    %149 = memref.load %arg1[%c38] : memref<41xf32, #tpu.memory_space<smem>>
    %150 = vector.broadcast %149 : f32 to vector<8x128xf32>
    %151 = arith.mulf %150, %148 : vector<8x128xf32>
    %152 = arith.addf %136, %151 : vector<8x128xf32>
    %c18 = arith.constant 18 : index
    %153 = memref.load %arg1[%c18] : memref<41xf32, #tpu.memory_space<smem>>
    %154 = vector.broadcast %153 : f32 to vector<8x128xf32>
    %155 = arith.mulf %154, %4 : vector<8x128xf32>
    %c19 = arith.constant 19 : index
    %156 = memref.load %arg1[%c19] : memref<41xf32, #tpu.memory_space<smem>>
    %157 = vector.broadcast %156 : f32 to vector<8x128xf32>
    %158 = arith.mulf %157, %7 : vector<8x128xf32>
    %159 = arith.addf %155, %158 : vector<8x128xf32>
    %c29 = arith.constant 29 : index
    %160 = memref.load %arg1[%c29] : memref<41xf32, #tpu.memory_space<smem>>
    %161 = vector.broadcast %160 : f32 to vector<8x128xf32>
    %162 = arith.addf %159, %161 : vector<8x128xf32>
    %cst_13 = arith.constant 0.000000e+00 : f32
    %163 = vector.broadcast %cst_13 : f32 to vector<8x128xf32>
    %164 = arith.maximumf %162, %163 : vector<8x128xf32>
    %c39 = arith.constant 39 : index
    %165 = memref.load %arg1[%c39] : memref<41xf32, #tpu.memory_space<smem>>
    %166 = vector.broadcast %165 : f32 to vector<8x128xf32>
    %167 = arith.mulf %166, %164 : vector<8x128xf32>
    %168 = arith.addf %152, %167 : vector<8x128xf32>
    %c40 = arith.constant 40 : index
    %169 = memref.load %arg1[%c40] : memref<41xf32, #tpu.memory_space<smem>>
    %170 = vector.broadcast %169 : f32 to vector<8x128xf32>
    %171 = arith.addf %168, %170 : vector<8x128xf32>
    %cst_14 = arith.constant 0.000000e+00 : f32
    %172 = vector.broadcast %cst_14 : f32 to vector<8x128xf32>
    %173 = arith.subf %172, %171 : vector<8x128xf32>
    %174 = math.exp %173 : vector<8x128xf32>
    %cst_15 = arith.constant 1.000000e+00 : f32
    %175 = vector.broadcast %cst_15 : f32 to vector<8x128xf32>
    %176 = arith.addf %175, %174 : vector<8x128xf32>
    %177 = tpu.reciprocal %176 {approx = true} : vector<8x128xf32> -> vector<8x128xf32>
    %178 = arith.index_cast %1 : i32 to index
    %c0_16 = arith.constant 0 : index
    %179 = vector.load %arg3[%178, %c0_16] : memref<8x128xf32, #tpu.memory_space<vmem>>, vector<8x128xf32>
    tpu.vector_store %arg3[%178, %c0_16], %177 {strides = array<i32>} : memref<8x128xf32, #tpu.memory_space<vmem>>, vector<8x128xf32>,
    %c1_i32 = arith.constant 1 : i32
    return
  }
  func.func @transform_0(%arg0: i32, %arg1: memref<41xf32, #tpu.memory_space<smem>>) -> (i32, i32, i32) {
    %c0_i32 = arith.constant 0 : i32
    %c0_i32_0 = arith.constant 0 : i32
    %c0_i32_1 = arith.constant 0 : i32
    return %c0_i32, %arg0, %c0_i32_0 : i32, i32, i32
  }
  func.func @transform_1(%arg0: i32, %arg1: memref<41xf32, #tpu.memory_space<smem>>) -> (i32, i32) {
    %c0_i32 = arith.constant 0 : i32
    %c0_i32_0 = arith.constant 0 : i32
    return %arg0, %c0_i32 : i32, i32
  }
}

</mosaic_0001>

<llo_original>
// kernel: tpu_custom_call.1
$region0: #{tpu_custom_call.1}
  #allocation0 [shape = 'u32[]', space=smem, size = 0x4, offset = 0x4, fixed_abs, tag = 'smem constant byte address 0x4 - core index']
  #allocation1 [shape = 'u32[144,128]{1,0:T(1,128)}', space=vmem, size = 0x12000, scoped, tag = 'internal scratch']
  #allocation2 [shape = 's32[1]{0}', space=sflag, size = 0x4, scoped, tag = 'scoped memory for tpu_custom_call.1']
  #allocation3 [shape = 'u8[512]{0}', space=smem, size = 0x200, scoped, tag = 'prefetched SMEM operand 0']
  %s0 = inlined_call_operand.hbm [shape: f32[41], index: 0, kind: input, shape index: {}]
  %s1 = inlined_call_operand.hbm [shape: f32[2,8,128], index: 1, kind: input, shape index: {}]
  %s2 = inlined_call_operand.hbm [shape: f32[8,128], index: 2, kind: output, shape index: {}]
  %s3 = sld [smem:[#allocation0]]
  $region18: #{tpu_custom_call.1} parent=0
    _
  %s5 = ssub.s32 1, %s3
  %s6 = scalar_select 0, %s5, %s3
  %8 = dma.hbm_to_smem %s0, 16, [#allocation3], [#allocation2]
  %9 = dma.done [#allocation2], 16
  %10 = sfence
  $region1: #{tpu_custom_call.1} parent=0
    #allocation4 [shape = 'u8[8192]{0}', space=vmem, size = 0x2000, scoped, tag = 'input window, operand 1, single buffered']
    #allocation5 [shape = 's32[1]{0}', space=sflag, size = 0x4, scoped, tag = 'scoped memory for tpu_custom_call.1']
    #allocation6 [shape = 's32[1]{0}', space=sflag, size = 0x4, scoped, tag = 'scoped memory for tpu_custom_call.1']
    #allocation7 [shape = 'u8[4096]{0}', space=vmem, size = 0x1000, scoped, tag = 'output window, operand 0, single buffered']
    %11 = vsyncpa [#allocation5], 0
    %12 = vsyncpa [#allocation6], 0
    // Predicated region
    $region2: #{tpu_custom_call.1} parent=1 // pred_check
      _
    $region3: #{tpu_custom_call.1} parent=1 // pred_check_branch
      %14 = sbr.rel (0) target = $region5
    $region4: #{tpu_custom_call.1} parent=1 // pred_region
      %s16 = ssub.s32 256, 256
      %17 = vsyncadd [#allocation5], %s16
      %s18 = sshll.u32 [#allocation4], 4
      %s19 = int_to_ptr.vmem [resolvable:$true] %s18
      %24 = dma.hbm_to_vmem [thread:$0]  %s1, 256, %s19, [#allocation5], 128, 128, 8
    $region5: #{tpu_custom_call.1} parent=1 // pred_fallthru
      _
    // Predicated region
    $region6: #{tpu_custom_call.1} parent=1 // pred_check
      _
    $region7: #{tpu_custom_call.1} parent=1 // pred_check_branch
      %26 = sbr.rel (0) target = $region9
    $region8: #{tpu_custom_call.1} parent=1 // pred_region
      %27 = dma.done [#allocation5], 256
    $region9: #{tpu_custom_call.1} parent=1 // pred_fallthru
      _
    %v28 = vld [vmem:[#allocation4] sm:$0xff]
    %s29 = sadd.s32 0, 8
    %s30 = scalar_lea.vmem [#allocation4], %s29
    %v31 = vld [vmem:[%s30] sm:$0xff]
    %s32 = sld [smem:[#allocation3]]
    %v33 = vstv %s32
    %v34 = vmul.f32 %v33, %v28
    %s35 = sld [smem:[#allocation3 + $0x1]]
    %v36 = vstv %s35
    %v37 = vmul.f32 %v36, %v31
    %v38 = vadd.f32 %v34, %v37
    %s39 = sld [smem:[#allocation3 + $0x14]]
    %v40 = vstv %s39
    %v41 = vadd.f32 %v38, %v40
    %v42 = vmax.f32 %v41, 0.0
    %s43 = sld [smem:[#allocation3 + $0x1e]]
    %v44 = vstv %s43
    %v45 = vmul.f32 %v44, %v42
    %v46 = vadd.f32 %v45, 0.0
    %s47 = sld [smem:[#allocation3 + $0x2]]
    %v48 = vstv %s47
    %v49 = vmul.f32 %v48, %v28
    %s50 = sld [smem:[#allocation3 + $0x3]]
    %v51 = vstv %s50
    %v52 = vmul.f32 %v51, %v31
    %v53 = vadd.f32 %v49, %v52
    %s54 = sld [smem:[#allocation3 + $0x15]]
    %v55 = vstv %s54
    %v56 = vadd.f32 %v53, %v55
    %v57 = vmax.f32 %v56, 0.0
    %s58 = sld [smem:[#allocation3 + $0x1f]]
    %v59 = vstv %s58
    %v60 = vmul.f32 %v59, %v57
    %v61 = vadd.f32 %v46, %v60
    %s62 = sld [smem:[#allocation3 + $0x4]]
    %v63 = vstv %s62
    %v64 = vmul.f32 %v63, %v28
    %s65 = sld [smem:[#allocation3 + $0x5]]
    %v66 = vstv %s65
    %v67 = vmul.f32 %v66, %v31
    %v68 = vadd.f32 %v64, %v67
    %s69 = sld [smem:[#allocation3 + $0x16]]
    %v70 = vstv %s69
    %v71 = vadd.f32 %v68, %v70
    %v72 = vmax.f32 %v71, 0.0
    %s73 = sld [smem:[#allocation3 + $0x20]]
    %v74 = vstv %s73
    %v75 = vmul.f32 %v74, %v72
    %v76 = vadd.f32 %v61, %v75
    %s77 = sld [smem:[#allocation3 + $0x6]]
    %v78 = vstv %s77
    %v79 = vmul.f32 %v78, %v28
    %s80 = sld [smem:[#allocation3 + $0x7]]
    %v81 = vstv %s80
    %v82 = vmul.f32 %v81, %v31
    %v83 = vadd.f32 %v79, %v82
    %s84 = sld [smem:[#allocation3 + $0x17]]
    %v85 = vstv %s84
    %v86 = vadd.f32 %v83, %v85
    %v87 = vmax.f32 %v86, 0.0
    %s88 = sld [smem:[#allocation3 + $0x21]]
    %v89 = vstv %s88
    %v90 = vmul.f32 %v89, %v87
    %v91 = vadd.f32 %v76, %v90
    %s92 = sld [smem:[#allocation3 + $0x8]]
    %v93 = vstv %s92
    %v94 = vmul.f32 %v93, %v28
    %s95 = sld [smem:[#allocation3 + $0x9]]
    %v96 = vstv %s95
    %v97 = vmul.f32 %v96, %v31
    %v98 = vadd.f32 %v94, %v97
    %s99 = sld [smem:[#allocation3 + $0x18]]
    %v100 = vstv %s99
    %v101 = vadd.f32 %v98, %v100
    %v102 = vmax.f32 %v101, 0.0
    %s103 = sld [smem:[#allocation3 + $0x22]]
    %v104 = vstv %s103
    %v105 = vmul.f32 %v104, %v102
    %v106 = vadd.f32 %v91, %v105
    %s107 = sld [smem:[#allocation3 + $0xa]]
    %v108 = vstv %s107
    %v109 = vmul.f32 %v108, %v28
    %s110 = sld [smem:[#allocation3 + $0xb]]
    %v111 = vstv %s110
    %v112 = vmul.f32 %v111, %v31
    %v113 = vadd.f32 %v109, %v112
    %s114 = sld [smem:[#allocation3 + $0x19]]
    %v115 = vstv %s114
    %v116 = vadd.f32 %v113, %v115
    %v117 = vmax.f32 %v116, 0.0
    %s118 = sld [smem:[#allocation3 + $0x23]]
    %v119 = vstv %s118
    %v120 = vmul.f32 %v119, %v117
    %v121 = vadd.f32 %v106, %v120
    %s122 = sld [smem:[#allocation3 + $0xc]]
    %v123 = vstv %s122
    %v124 = vmul.f32 %v123, %v28
    %s125 = sld [smem:[#allocation3 + $0xd]]
    %v126 = vstv %s125
    %v127 = vmul.f32 %v126, %v31
    %v128 = vadd.f32 %v124, %v127
    %s129 = sld [smem:[#allocation3 + $0x1a]]
    %v130 = vstv %s129
    %v131 = vadd.f32 %v128, %v130
    %v132 = vmax.f32 %v131, 0.0
    %s133 = sld [smem:[#allocation3 + $0x24]]
    %v134 = vstv %s133
    %v135 = vmul.f32 %v134, %v132
    %v136 = vadd.f32 %v121, %v135
    %s137 = sld [smem:[#allocation3 + $0xe]]
    %v138 = vstv %s137
    %v139 = vmul.f32 %v138, %v28
    %s140 = sld [smem:[#allocation3 + $0xf]]
    %v141 = vstv %s140
    %v142 = vmul.f32 %v141, %v31
    %v143 = vadd.f32 %v139, %v142
    %s144 = sld [smem:[#allocation3 + $0x1b]]
    %v145 = vstv %s144
    %v146 = vadd.f32 %v143, %v145
    %v147 = vmax.f32 %v146, 0.0
    %s148 = sld [smem:[#allocation3 + $0x25]]
    %v149 = vstv %s148
    %v150 = vmul.f32 %v149, %v147
    %v151 = vadd.f32 %v136, %v150
    %s152 = sld [smem:[#allocation3 + $0x10]]
    %v153 = vstv %s152
    %v154 = vmul.f32 %v153, %v28
    %s155 = sld [smem:[#allocation3 + $0x11]]
    %v156 = vstv %s155
    %v157 = vmul.f32 %v156, %v31
    %v158 = vadd.f32 %v154, %v157
    %s159 = sld [smem:[#allocation3 + $0x1c]]
    %v160 = vstv %s159
    %v161 = vadd.f32 %v158, %v160
    %v162 = vmax.f32 %v161, 0.0
    %s163 = sld [smem:[#allocation3 + $0x26]]
    %v164 = vstv %s163
    %v165 = vmul.f32 %v164, %v162
    %v166 = vadd.f32 %v151, %v165
    %s167 = sld [smem:[#allocation3 + $0x12]]
    %v168 = vstv %s167
    %v169 = vmul.f32 %v168, %v28
    %s170 = sld [smem:[#allocation3 + $0x13]]
    %v171 = vstv %s170
    %v172 = vmul.f32 %v171, %v31
    %v173 = vadd.f32 %v169, %v172
    %s174 = sld [smem:[#allocation3 + $0x1d]]
    %v175 = vstv %s174
    %v176 = vadd.f32 %v173, %v175
    %v177 = vmax.f32 %v176, 0.0
    %s178 = sld [smem:[#allocation3 + $0x27]]
    %v179 = vstv %s178
    %v180 = vmul.f32 %v179, %v177
    %v181 = vadd.f32 %v166, %v180
    %s182 = sld [smem:[#allocation3 + $0x28]]
    %v183 = vstv %s182
    %v184 = vadd.f32 %v181, %v183
    %v185 = vsub.f32 0.0, %v184
    %v186 = vmul.f32 %v185, 1.442695
    %v187 = vpow.pop %v186
    %v188 = vadd.f32 %v187, 1.0
    %v189 = vrcp.pop %v188
    %190 = vst [vmem:[#allocation7] sm:$0xff] %v189
    // Predicated region
    $region10: #{tpu_custom_call.1} parent=1 // pred_check
      _
    $region11: #{tpu_custom_call.1} parent=1 // pred_check_branch
      %192 = sbr.rel (0) target = $region13
    $region12: #{tpu_custom_call.1} parent=1 // pred_region
      %s194 = ssub.s32 128, 128
      %195 = vsyncadd [#allocation6], %s194
      %s197 = sshll.u32 [#allocation7], 4
      %s198 = int_to_ptr.vmem [resolvable:$true] %s197
      %200 = dma.vmem_to_hbm [thread:$0]  %s198, 128, %s2, [#allocation6]
    $region13: #{tpu_custom_call.1} parent=1 // pred_fallthru
      _
    // Predicated region
    $region14: #{tpu_custom_call.1} parent=1 // pred_check
      _
    $region15: #{tpu_custom_call.1} parent=1 // pred_check_branch
      %202 = sbr.rel (0) target = $region17
    $region16: #{tpu_custom_call.1} parent=1 // pred_region
      %203 = dma.done [#allocation6], 128
    $region17: #{tpu_custom_call.1} parent=1 // pred_fallthru
      _
    %204 = vsyncpa [#allocation5], 1
    %205 = vsyncpa [#allocation6], 1

</llo_original>
